<compile_context>
chip_gen: v6e
topology: v6e:2x2x1
jax: 0.10.0
libtpu: 0.0.40
codegen_flags: <defaults>
</compile_context>

<pallas_src>
import functools

import jax
import jax.numpy as jnp
from jax.experimental import pallas as pl
from jax.experimental.pallas import tpu as pltpu


# ---------------------------------------------------------------------------
# Fused Pallas kernel: conv1..conv5 (+ReLU) + Linear
# ---------------------------------------------------------------------------
def _gnn_fused_kernel(a_ref, dinv_ref, x_ref, w_ref, b_ref, lw_ref, lb_ref, o_ref,
                      *, num_layers):
    """a_ref:   (N, N)  bf16 exact 0/1 (edge-count) adjacency, A[dst, src]
       dinv_ref:(N, 1)  f32  1/in_degree (0 for isolated nodes)
       x_ref:   (N, Cmax) f32 node features, zero-padded to Cmax channels
       w_ref:   (L, 2*Cmax, Cmax) bf16, rows [0:Cmax)=W_l, [Cmax:2Cmax)=W_r
                ([Cin, Cout] layout, zero-padded)
       b_ref:   (L, 1, Cmax) f32 zero-padded lin_l biases
       lw_ref:  (Cmax, 128) f32 final Linear weight (only [:4, :1] nonzero)
       lb_ref:  (1, 128) f32 final Linear bias (only [0, 0] nonzero)
       o_ref:   (N, 128) f32 lane-dense output slab (column 0 is the result)
    """
    a = a_ref[...]                       # bf16, VMEM/vreg resident for all layers
    dinv = dinv_ref[...]                 # f32
    x = x_ref[...]                       # f32 activation carry, shape fixed (N, Cmax)

    # Static Python loop: tiny fixed trip count, uniform shapes every iteration.
    for l in range(num_layers):
        xb = x.astype(jnp.bfloat16)
        # Exact integer sum on the MXU (f32 acc), mean applied at f32 precision.
        agg = jnp.dot(a, xb, preferred_element_type=jnp.float32) * dinv
        # Single packed channel matmul: concat([agg, x]) @ [W_l; W_r].
        cat = jnp.concatenate([agg.astype(jnp.bfloat16), xb], axis=-1)  # (N, 2*Cmax)
        h = jnp.dot(cat, w_ref[l], preferred_element_type=jnp.float32) + b_ref[l]
        x = jnp.maximum(h, 0.0)          # F.relu (f32 epilogue; keep f32 on v5e)

    # TODO(synk): F.dropout(training=True) omitted; eval-mode semantics (identity).
    out = jnp.dot(x, lw_ref[...], preferred_element_type=jnp.float32) + lb_ref[...]
    o_ref[...] = out                     # lane-dense 128-wide unmasked store


def gnn_mean_fused(A, deg_inv, x, w_stack, b_stack, lin_w, lin_b, *, num_layers):
    N = x.shape[0]
    return pl.pallas_call(
        functools.partial(_gnn_fused_kernel, num_layers=num_layers),
        out_shape=jax.ShapeDtypeStruct((N, 128), jnp.float32),
        in_specs=[
            pl.BlockSpec(A.shape, lambda: (0, 0)),
            pl.BlockSpec(deg_inv.shape, lambda: (0, 0)),
            pl.BlockSpec(x.shape, lambda: (0, 0)),
            pl.BlockSpec(w_stack.shape, lambda: (0, 0, 0)),
            pl.BlockSpec(b_stack.shape, lambda: (0, 0, 0)),
            pl.BlockSpec(lin_w.shape, lambda: (0, 0)),
            pl.BlockSpec(lin_b.shape, lambda: (0, 0)),
        ],
        out_specs=pl.BlockSpec((N, 128), lambda: (0, 0)),
        compiler_params=pltpu.CompilerParams(vmem_limit_bytes=32 * 1024 * 1024),
    )(A, deg_inv, x, w_stack, b_stack, lin_w, lin_b)


# ---------------------------------------------------------------------------
# Parameter construction / packing (deterministic, synthetic)
# ---------------------------------------------------------------------------
def init_sage_params(key, c_in, c_out):
    k1, k2, k3 = jax.random.split(key, 3)
    scale = 1.0 / jnp.sqrt(jnp.float32(c_in))
    wl = jax.random.normal(k1, (c_in, c_out), jnp.float32) * scale  # lin_l (has bias)
    wr = jax.random.normal(k2, (c_in, c_out), jnp.float32) * scale  # lin_r (no bias)
    bl = jax.random.normal(k3, (1, c_out), jnp.float32) * 0.01
    return wl, wr, bl


def init_linear_params(key, c_in, c_out):
    k1, k2 = jax.random.split(key)
    scale = 1.0 / jnp.sqrt(jnp.float32(c_in))
    w = jax.random.normal(k1, (c_in, c_out), jnp.float32) * scale
    b = jax.random.normal(k2, (1, c_out), jnp.float32) * 0.01
    return w, b


def pack_conv_params(conv_params, c_max):
    """Zero-pad per-layer (Wl, Wr, b) into one [L, 2*Cmax, Cmax] weight stack
    (rows [0:Cmax)=W_l, rows [Cmax:2Cmax)=W_r) plus a [L, 1, Cmax] bias stack.
    Note: weights are [Cin, Cout]; real PyTorch/PyG checkpoints ([Cout, Cin])
    must be transposed before packing."""
    L = len(conv_params)
    w = jnp.zeros((L, 2 * c_max, c_max), jnp.float32)
    b = jnp.zeros((L, 1, c_max), jnp.float32)
    for l, (wl_l, wr_l, b_l) in enumerate(conv_params):
        ci, co = wl_l.shape
        w = w.at[l, :ci, :co].set(wl_l)
        w = w.at[l, c_max:c_max + ci, :co].set(wr_l)
        b = b.at[l, :, :co].set(b_l)
    # bf16 MXU inputs (f32 accumulation inside the kernel); bias stays f32.
    return w.astype(jnp.bfloat16), b


def pack_linear_params(lin_w, lin_b, c_max, lane_pad=128):
    """Zero-pad the final Linear to (Cmax, 128)/(1, 128) for a lane-dense store."""
    ci, co = lin_w.shape
    lw = jnp.zeros((c_max, lane_pad), jnp.float32).at[:ci, :co].set(lin_w)
    lb = jnp.zeros((1, lane_pad), jnp.float32).at[:, :co].set(lin_b)
    return lw, lb


def build_adjacency(edge_index, num_nodes):
    """Dense exact edge-count adjacency A[dst, src] (bf16-exact small ints) and
    f32 inverse in-degree (0 for isolated nodes)."""
    src = edge_index[0]
    dst = edge_index[1]
    A = jnp.zeros((num_nodes, num_nodes), jnp.float32).at[dst, src].add(1.0)
    deg = jnp.sum(A, axis=1, keepdims=True)
    deg_inv = jnp.where(deg > 0, 1.0 / jnp.maximum(deg, 1.0), 0.0)
    return A.astype(jnp.bfloat16), deg_inv


# ---------------------------------------------------------------------------
# Full forward pass (mirrors GNN_MEAN.forward)
# ---------------------------------------------------------------------------
def gnn_mean_forward(params, x, edge_index, batch_size):
    x = x.reshape(-1, 2)                                   # x.view(-1, 2)
    N, c0 = x.shape
    c_max = params["c_max"]
    x_pad = jnp.pad(x, ((0, 0), (0, c_max - c0)))          # uniform Cmax channel width
    A, deg_inv = build_adjacency(edge_index, N)            # glue: scatter -> matmul operand
    w_stack, b_stack = params["conv_stack"]
    lw_pad, lb_pad = params["lin"]
    out = gnn_mean_fused(A, deg_inv, x_pad, w_stack, b_stack, lw_pad, lb_pad,
                         num_layers=params["num_layers"])  # conv1..5 + relu + lin fused
    out = out[:, :1]                                       # column 0 of lane-dense slab
    return out.reshape(batch_size, -1)                     # x.view(batch_size, -1)


if __name__ == "__main__":
    # in_channels=2 (forced by x.view(-1, 2)), hidden_channels=32, out_channels=4.
    in_channels, hidden_channels, out_channels = 2, 32, 4
    num_nodes, num_edges, batch_size = 64, 256, 2

    key = jax.random.PRNGKey(0)
    k_x, k_e, k_p = jax.random.split(key, 3)

    x = jax.random.normal(k_x, (num_nodes, in_channels), jnp.float32)
    edge_index = jax.random.randint(k_e, (2, num_edges), 0, num_nodes, jnp.int32)

    layer_dims = [
        (in_channels, hidden_channels),
        (hidden_channels, hidden_channels),
        (hidden_channels, hidden_channels // 4),
        (hidden_channels // 4, hidden_channels // 4),
        (hidden_channels // 4, out_channels),
    ]
    keys = jax.random.split(k_p, len(layer_dims) + 1)
    conv_params = [init_sage_params(keys[i], ci, co)
                   for i, (ci, co) in enumerate(layer_dims)]
    c_max = max(max(ci, co) for ci, co in layer_dims)
    w_stack, b_stack = pack_conv_params(conv_params, c_max)
    lin_w, lin_b = init_linear_params(keys[-1], out_channels, 1)
    lw_pad, lb_pad = pack_linear_params(lin_w, lin_b, c_max)

    params = {
        "conv_stack": (w_stack, b_stack),
        "lin": (lw_pad, lb_pad),
        "num_layers": len(layer_dims),
        "c_max": c_max,
    }

    out = gnn_mean_forward(params, x, edge_index, batch_size)
    out = jax.block_until_ready(out)
    assert out.shape == (batch_size, num_nodes // batch_size), out.shape
    print("KERNEL_OK")
</pallas_src>

<mosaic_0001>
module attributes {stable_mosaic.version = 11 : i64} {
  func.func @_gnn_fused_kernel(%arg0: memref<64x64xbf16, #tpu.memory_space<vmem>>, %arg1: memref<64x1xf32, #tpu.memory_space<vmem>>, %arg2: memref<64x32xf32, #tpu.memory_space<vmem>>, %arg3: memref<5x64x32xbf16, #tpu.memory_space<vmem>>, %arg4: memref<5x1x32xf32, #tpu.memory_space<vmem>>, %arg5: memref<32x128xf32, #tpu.memory_space<vmem>>, %arg6: memref<1x128xf32, #tpu.memory_space<vmem>>, %arg7: memref<64x128xf32, #tpu.memory_space<vmem>>) attributes {dimension_semantics = [], scalar_prefetch = 0 : i64, scratch_operands = 0 : i64, tpu.core_type = #tpu.core_type<tc>} {
    %c0 = arith.constant 0 : index
    %c0_0 = arith.constant 0 : index
    %0 = vector.load %arg0[%c0, %c0_0] : memref<64x64xbf16, #tpu.memory_space<vmem>>, vector<64x64xbf16>
    %c0_1 = arith.constant 0 : index
    %c0_2 = arith.constant 0 : index
    %1 = vector.load %arg1[%c0_1, %c0_2] : memref<64x1xf32, #tpu.memory_space<vmem>>, vector<64x1xf32>
    %c0_3 = arith.constant 0 : index
    %c0_4 = arith.constant 0 : index
    %2 = vector.load %arg2[%c0_3, %c0_4] : memref<64x32xf32, #tpu.memory_space<vmem>>, vector<64x32xf32>
    %3 = arith.truncf %2 : vector<64x32xf32> to vector<64x32xbf16>
    %cst = arith.constant dense<0.000000e+00> : vector<64x32xf32>
    %4 = tpu.matmul %0, %3, %cst {dimension_numbers = #tpu.dot_dimension_numbers<[1], [0], [0], [1], [0, 0, 1, 1], [], []>} : vector<64x64xbf16>, vector<64x32xbf16>, vector<64x32xf32> -> vector<64x32xf32>
    %5 = vector.broadcast %1 : vector<64x1xf32> to vector<64x32xf32>
    %6 = arith.mulf %4, %5 : vector<64x32xf32>
    %7 = arith.truncf %6 : vector<64x32xf32> to vector<64x32xbf16>
    %8 = tpu.concatenate %7, %3 in 1 : vector<64x32xbf16>, vector<64x32xbf16> -> vector<64x64xbf16>
    %c0_5 = arith.constant 0 : index
    %c0_6 = arith.constant 0 : index
    %c0_7 = arith.constant 0 : index
    %9 = vector.load %arg3[%c0_5, %c0_6, %c0_7] : memref<5x64x32xbf16, #tpu.memory_space<vmem>>, vector<1x64x32xbf16>
    %10 = vector.shape_cast %9 : vector<1x64x32xbf16> to vector<64x32xbf16>
    %cst_8 = arith.constant dense<0.000000e+00> : vector<64x32xf32>
    %11 = tpu.matmul %8, %10, %cst_8 {dimension_numbers = #tpu.dot_dimension_numbers<[1], [0], [0], [1], [0, 0, 1, 1], [], []>} : vector<64x64xbf16>, vector<64x32xbf16>, vector<64x32xf32> -> vector<64x32xf32>
    %c0_9 = arith.constant 0 : index
    %c0_10 = arith.constant 0 : index
    %c0_11 = arith.constant 0 : index
    %12 = vector.load %arg4[%c0_9, %c0_10, %c0_11] : memref<5x1x32xf32, #tpu.memory_space<vmem>>, vector<1x1x32xf32>
    %13 = vector.shape_cast %12 : vector<1x1x32xf32> to vector<1x32xf32>
    %14 = vector.broadcast %13 : vector<1x32xf32> to vector<64x32xf32>
    %15 = arith.addf %11, %14 : vector<64x32xf32>
    %cst_12 = arith.constant 0.000000e+00 : f32
    %16 = vector.broadcast %cst_12 : f32 to vector<64x32xf32>
    %17 = arith.maximumf %15, %16 : vector<64x32xf32>
    %18 = arith.truncf %17 : vector<64x32xf32> to vector<64x32xbf16>
    %cst_13 = arith.constant dense<0.000000e+00> : vector<64x32xf32>
    %19 = tpu.matmul %0, %18, %cst_13 {dimension_numbers = #tpu.dot_dimension_numbers<[1], [0], [0], [1], [0, 0, 1, 1], [], []>} : vector<64x64xbf16>, vector<64x32xbf16>, vector<64x32xf32> -> vector<64x32xf32>
    %20 = vector.broadcast %1 : vector<64x1xf32> to vector<64x32xf32>
    %21 = arith.mulf %19, %20 : vector<64x32xf32>
    %22 = arith.truncf %21 : vector<64x32xf32> to vector<64x32xbf16>
    %23 = tpu.concatenate %22, %18 in 1 : vector<64x32xbf16>, vector<64x32xbf16> -> vector<64x64xbf16>
    %c1 = arith.constant 1 : index
    %c0_14 = arith.constant 0 : index
    %c0_15 = arith.constant 0 : index
    %24 = vector.load %arg3[%c1, %c0_14, %c0_15] : memref<5x64x32xbf16, #tpu.memory_space<vmem>>, vector<1x64x32xbf16>
    %25 = vector.shape_cast %24 : vector<1x64x32xbf16> to vector<64x32xbf16>
    %cst_16 = arith.constant dense<0.000000e+00> : vector<64x32xf32>
    %26 = tpu.matmul %23, %25, %cst_16 {dimension_numbers = #tpu.dot_dimension_numbers<[1], [0], [0], [1], [0, 0, 1, 1], [], []>} : vector<64x64xbf16>, vector<64x32xbf16>, vector<64x32xf32> -> vector<64x32xf32>
    %c1_17 = arith.constant 1 : index
    %c0_18 = arith.constant 0 : index
    %c0_19 = arith.constant 0 : index
    %27 = vector.load %arg4[%c1_17, %c0_18, %c0_19] : memref<5x1x32xf32, #tpu.memory_space<vmem>>, vector<1x1x32xf32>
    %28 = vector.shape_cast %27 : vector<1x1x32xf32> to vector<1x32xf32>
    %29 = vector.broadcast %28 : vector<1x32xf32> to vector<64x32xf32>
    %30 = arith.addf %26, %29 : vector<64x32xf32>
    %cst_20 = arith.constant 0.000000e+00 : f32
    %31 = vector.broadcast %cst_20 : f32 to vector<64x32xf32>
    %32 = arith.maximumf %30, %31 : vector<64x32xf32>
    %33 = arith.truncf %32 : vector<64x32xf32> to vector<64x32xbf16>
    %cst_21 = arith.constant dense<0.000000e+00> : vector<64x32xf32>
    %34 = tpu.matmul %0, %33, %cst_21 {dimension_numbers = #tpu.dot_dimension_numbers<[1], [0], [0], [1], [0, 0, 1, 1], [], []>} : vector<64x64xbf16>, vector<64x32xbf16>, vector<64x32xf32> -> vector<64x32xf32>
    %35 = vector.broadcast %1 : vector<64x1xf32> to vector<64x32xf32>
    %36 = arith.mulf %34, %35 : vector<64x32xf32>
    %37 = arith.truncf %36 : vector<64x32xf32> to vector<64x32xbf16>
    %38 = tpu.concatenate %37, %33 in 1 : vector<64x32xbf16>, vector<64x32xbf16> -> vector<64x64xbf16>
    %c2 = arith.constant 2 : index
    %c0_22 = arith.constant 0 : index
    %c0_23 = arith.constant 0 : index
    %39 = vector.load %arg3[%c2, %c0_22, %c0_23] : memref<5x64x32xbf16, #tpu.memory_space<vmem>>, vector<1x64x32xbf16>
    %40 = vector.shape_cast %39 : vector<1x64x32xbf16> to vector<64x32xbf16>
    %cst_24 = arith.constant dense<0.000000e+00> : vector<64x32xf32>
    %41 = tpu.matmul %38, %40, %cst_24 {dimension_numbers = #tpu.dot_dimension_numbers<[1], [0], [0], [1], [0, 0, 1, 1], [], []>} : vector<64x64xbf16>, vector<64x32xbf16>, vector<64x32xf32> -> vector<64x32xf32>
    %c2_25 = arith.constant 2 : index
    %c0_26 = arith.constant 0 : index
    %c0_27 = arith.constant 0 : index
    %42 = vector.load %arg4[%c2_25, %c0_26, %c0_27] : memref<5x1x32xf32, #tpu.memory_space<vmem>>, vector<1x1x32xf32>
    %43 = vector.shape_cast %42 : vector<1x1x32xf32> to vector<1x32xf32>
    %44 = vector.broadcast %43 : vector<1x32xf32> to vector<64x32xf32>
    %45 = arith.addf %41, %44 : vector<64x32xf32>
    %cst_28 = arith.constant 0.000000e+00 : f32
    %46 = vector.broadcast %cst_28 : f32 to vector<64x32xf32>
    %47 = arith.maximumf %45, %46 : vector<64x32xf32>
    %48 = arith.truncf %47 : vector<64x32xf32> to vector<64x32xbf16>
    %cst_29 = arith.constant dense<0.000000e+00> : vector<64x32xf32>
    %49 = tpu.matmul %0, %48, %cst_29 {dimension_numbers = #tpu.dot_dimension_numbers<[1], [0], [0], [1], [0, 0, 1, 1], [], []>} : vector<64x64xbf16>, vector<64x32xbf16>, vector<64x32xf32> -> vector<64x32xf32>
    %50 = vector.broadcast %1 : vector<64x1xf32> to vector<64x32xf32>
    %51 = arith.mulf %49, %50 : vector<64x32xf32>
    %52 = arith.truncf %51 : vector<64x32xf32> to vector<64x32xbf16>
    %53 = tpu.concatenate %52, %48 in 1 : vector<64x32xbf16>, vector<64x32xbf16> -> vector<64x64xbf16>
    %c3 = arith.constant 3 : index
    %c0_30 = arith.constant 0 : index
    %c0_31 = arith.constant 0 : index
    %54 = vector.load %arg3[%c3, %c0_30, %c0_31] : memref<5x64x32xbf16, #tpu.memory_space<vmem>>, vector<1x64x32xbf16>
    %55 = vector.shape_cast %54 : vector<1x64x32xbf16> to vector<64x32xbf16>
    %cst_32 = arith.constant dense<0.000000e+00> : vector<64x32xf32>
    %56 = tpu.matmul %53, %55, %cst_32 {dimension_numbers = #tpu.dot_dimension_numbers<[1], [0], [0], [1], [0, 0, 1, 1], [], []>} : vector<64x64xbf16>, vector<64x32xbf16>, vector<64x32xf32> -> vector<64x32xf32>
    %c3_33 = arith.constant 3 : index
    %c0_34 = arith.constant 0 : index
    %c0_35 = arith.constant 0 : index
    %57 = vector.load %arg4[%c3_33, %c0_34, %c0_35] : memref<5x1x32xf32, #tpu.memory_space<vmem>>, vector<1x1x32xf32>
    %58 = vector.shape_cast %57 : vector<1x1x32xf32> to vector<1x32xf32>
    %59 = vector.broadcast %58 : vector<1x32xf32> to vector<64x32xf32>
    %60 = arith.addf %56, %59 : vector<64x32xf32>
    %cst_36 = arith.constant 0.000000e+00 : f32
    %61 = vector.broadcast %cst_36 : f32 to vector<64x32xf32>
    %62 = arith.maximumf %60, %61 : vector<64x32xf32>
    %63 = arith.truncf %62 : vector<64x32xf32> to vector<64x32xbf16>
    %cst_37 = arith.constant dense<0.000000e+00> : vector<64x32xf32>
    %64 = tpu.matmul %0, %63, %cst_37 {dimension_numbers = #tpu.dot_dimension_numbers<[1], [0], [0], [1], [0, 0, 1, 1], [], []>} : vector<64x64xbf16>, vector<64x32xbf16>, vector<64x32xf32> -> vector<64x32xf32>
    %65 = vector.broadcast %1 : vector<64x1xf32> to vector<64x32xf32>
    %66 = arith.mulf %64, %65 : vector<64x32xf32>
    %67 = arith.truncf %66 : vector<64x32xf32> to vector<64x32xbf16>
    %68 = tpu.concatenate %67, %63 in 1 : vector<64x32xbf16>, vector<64x32xbf16> -> vector<64x64xbf16>
    %c4 = arith.constant 4 : index
    %c0_38 = arith.constant 0 : index
    %c0_39 = arith.constant 0 : index
    %69 = vector.load %arg3[%c4, %c0_38, %c0_39] : memref<5x64x32xbf16, #tpu.memory_space<vmem>>, vector<1x64x32xbf16>
    %70 = vector.shape_cast %69 : vector<1x64x32xbf16> to vector<64x32xbf16>
    %cst_40 = arith.constant dense<0.000000e+00> : vector<64x32xf32>
    %71 = tpu.matmul %68, %70, %cst_40 {dimension_numbers = #tpu.dot_dimension_numbers<[1], [0], [0], [1], [0, 0, 1, 1], [], []>} : vector<64x64xbf16>, vector<64x32xbf16>, vector<64x32xf32> -> vector<64x32xf32>
    %c4_41 = arith.constant 4 : index
    %c0_42 = arith.constant 0 : index
    %c0_43 = arith.constant 0 : index
    %72 = vector.load %arg4[%c4_41, %c0_42, %c0_43] : memref<5x1x32xf32, #tpu.memory_space<vmem>>, vector<1x1x32xf32>
    %73 = vector.shape_cast %72 : vector<1x1x32xf32> to vector<1x32xf32>
    %74 = vector.broadcast %73 : vector<1x32xf32> to vector<64x32xf32>
    %75 = arith.addf %71, %74 : vector<64x32xf32>
    %cst_44 = arith.constant 0.000000e+00 : f32
    %76 = vector.broadcast %cst_44 : f32 to vector<64x32xf32>
    %77 = arith.maximumf %75, %76 : vector<64x32xf32>
    %c0_45 = arith.constant 0 : index
    %c0_46 = arith.constant 0 : index
    %78 = vector.load %arg5[%c0_45, %c0_46] : memref<32x128xf32, #tpu.memory_space<vmem>>, vector<32x128xf32>
    %cst_47 = arith.constant dense<0.000000e+00> : vector<64x128xf32>
    %79 = tpu.matmul %77, %78, %cst_47 {dimension_numbers = #tpu.dot_dimension_numbers<[1], [0], [0], [1], [0, 0, 1, 1], [], []>} : vector<64x32xf32>, vector<32x128xf32>, vector<64x128xf32> -> vector<64x128xf32>
    %c0_48 = arith.constant 0 : index
    %c0_49 = arith.constant 0 : index
    %80 = vector.load %arg6[%c0_48, %c0_49] : memref<1x128xf32, #tpu.memory_space<vmem>>, vector<1x128xf32>
    %81 = vector.broadcast %80 : vector<1x128xf32> to vector<64x128xf32>
    %82 = arith.addf %79, %81 : vector<64x128xf32>
    %c0_50 = arith.constant 0 : index
    %c0_51 = arith.constant 0 : index
    %83 = vector.load %arg7[%c0_50, %c0_51] : memref<64x128xf32, #tpu.memory_space<vmem>>, vector<64x128xf32>
    tpu.vector_store %arg7[%c0_50, %c0_51], %82 {strides = array<i32>} : memref<64x128xf32, #tpu.memory_space<vmem>>, vector<64x128xf32>,
    return
  }
}

</mosaic_0001>

<llo_original>
// kernel: tpu_custom_call.1
$region0: #{tpu_custom_call.1}
  #allocation0 [shape = 'u32[]', space=smem, size = 0x4, offset = 0x4, fixed_abs, tag = 'smem constant byte address 0x4 - core index']
  #allocation1 [shape = 'u32[144,128]{1,0:T(1,128)}', space=vmem, size = 0x12000, scoped, tag = 'internal scratch']
  %s0 = inlined_call_operand.vmem [shape: bf16[64,64], index: 0, kind: input, shape index: {}]
  %s1 = inlined_call_operand.vmem [shape: f32[64,1], index: 1, kind: input, shape index: {}]
  %s2 = inlined_call_operand.vmem [shape: f32[64,32], index: 2, kind: input, shape index: {}]
  %s3 = inlined_call_operand.vmem [shape: bf16[5,64,32], index: 3, kind: input, shape index: {}]
  %s4 = inlined_call_operand.vmem [shape: f32[5,1,32], index: 4, kind: input, shape index: {}]
  %s5 = inlined_call_operand.vmem [shape: f32[32,128], index: 5, kind: input, shape index: {}]
  %s6 = inlined_call_operand.vmem [shape: f32[1,128], index: 6, kind: input, shape index: {}]
  %s7 = inlined_call_operand.hbm [shape: f32[64,128], index: 7, kind: output, shape index: {}]
  %s8 = sld [smem:[#allocation0]]
  $region38: #{tpu_custom_call.1} parent=0
    _
  %s10 = ssub.s32 1, %s8
  %s11 = scalar_select 0, %s10, %s8
  $region1: #{tpu_custom_call.1} parent=0
    #allocation2 [shape = 'u8[32768]{0}', space=vmem, size = 0x8000, scoped, tag = 'output window, operand 0, single buffered']
    #allocation3 [shape = 's32[1]{0}', space=sflag, size = 0x4, scoped, tag = 'scoped memory for tpu_custom_call.1']
    %12 = vsyncpa [#allocation3], 0
    // Predicated region
    $region2: #{tpu_custom_call.1} parent=1 // pred_check
      _
    $region3: #{tpu_custom_call.1} parent=1 // pred_check_branch
      %14 = sbr.rel (0) target = $region5
    $region4: #{tpu_custom_call.1} parent=1 // pred_region
      _
    $region5: #{tpu_custom_call.1} parent=1 // pred_fallthru
      _
    // Predicated region
    $region6: #{tpu_custom_call.1} parent=1 // pred_check
      _
    $region7: #{tpu_custom_call.1} parent=1 // pred_check_branch
      %16 = sbr.rel (0) target = $region9
    $region8: #{tpu_custom_call.1} parent=1 // pred_region
      _
    $region9: #{tpu_custom_call.1} parent=1 // pred_fallthru
      _
    // Predicated region
    $region10: #{tpu_custom_call.1} parent=1 // pred_check
      _
    $region11: #{tpu_custom_call.1} parent=1 // pred_check_branch
      %18 = sbr.rel (0) target = $region13
    $region12: #{tpu_custom_call.1} parent=1 // pred_region
      _
    $region13: #{tpu_custom_call.1} parent=1 // pred_fallthru
      _
    // Predicated region
    $region14: #{tpu_custom_call.1} parent=1 // pred_check
      _
    $region15: #{tpu_custom_call.1} parent=1 // pred_check_branch
      %20 = sbr.rel (0) target = $region17
    $region16: #{tpu_custom_call.1} parent=1 // pred_region
      _
    $region17: #{tpu_custom_call.1} parent=1 // pred_fallthru
      _
    // Predicated region
    $region18: #{tpu_custom_call.1} parent=1 // pred_check
      _
    $region19: #{tpu_custom_call.1} parent=1 // pred_check_branch
      %22 = sbr.rel (0) target = $region21
    $region20: #{tpu_custom_call.1} parent=1 // pred_region
      _
    $region21: #{tpu_custom_call.1} parent=1 // pred_fallthru
      _
    // Predicated region
    $region22: #{tpu_custom_call.1} parent=1 // pred_check
      _
    $region23: #{tpu_custom_call.1} parent=1 // pred_check_branch
      %24 = sbr.rel (0) target = $region25
    $region24: #{tpu_custom_call.1} parent=1 // pred_region
      _
    $region25: #{tpu_custom_call.1} parent=1 // pred_fallthru
      _
    // Predicated region
    $region26: #{tpu_custom_call.1} parent=1 // pred_check
      _
    $region27: #{tpu_custom_call.1} parent=1 // pred_check_branch
      %26 = sbr.rel (0) target = $region29
    $region28: #{tpu_custom_call.1} parent=1 // pred_region
      _
    $region29: #{tpu_custom_call.1} parent=1 // pred_fallthru
      _
    %v28 = vld [vmem:[%s0] sm:$0xf]
    %v29 = vld [vmem:[%s0 + $0x4] sm:$0xf]
    %v30 = vld [vmem:[%s0 + $0x8] sm:$0xf]
    %v31 = vld [vmem:[%s0 + $0xc] sm:$0xf]
    %v32 = vld [vmem:[%s0 + $0x10] sm:$0xf]
    %v33 = vld [vmem:[%s0 + $0x14] sm:$0xf]
    %v34 = vld [vmem:[%s0 + $0x18] sm:$0xf]
    %v35 = vld [vmem:[%s0 + $0x1c] sm:$0xf]
    %v36 = vld [vmem:[%s1] sm:$0xff]
    %v37 = vld [vmem:[%s1 + $0x8] sm:$0xff]
    %v38 = vld [vmem:[%s1 + $0x10] sm:$0xff]
    %v39 = vld [vmem:[%s1 + $0x18] sm:$0xff]
    %v40 = vld [vmem:[%s1 + $0x20] sm:$0xff]
    %v41 = vld [vmem:[%s1 + $0x28] sm:$0xff]
    %v42 = vld [vmem:[%s1 + $0x30] sm:$0xff]
    %v43 = vld [vmem:[%s1 + $0x38] sm:$0xff]
    %v44 = vld [vmem:[%s2] sm:$0xff]
    %v45 = vld [vmem:[%s2 + $0x8] sm:$0xff]
    %v46 = vld [vmem:[%s2 + $0x10] sm:$0xff]
    %v47 = vld [vmem:[%s2 + $0x18] sm:$0xff]
    %v48 = vld [vmem:[%s2 + $0x20] sm:$0xff]
    %v49 = vld [vmem:[%s2 + $0x28] sm:$0xff]
    %v50 = vld [vmem:[%s2 + $0x30] sm:$0xff]
    %v51 = vld [vmem:[%s2 + $0x38] sm:$0xff]
    %v52 = vpack.c.bf16 %v45, %v44
    %v53 = vpack.c.bf16 %v47, %v46
    %v54 = vpack.c.bf16 %v49, %v48
    %v55 = vpack.c.bf16 %v51, %v50
    %v64 = vunpack.c.l.b16 %v28
    %v65 = vunpack.c.l.b16 %v29
    %v66 = vunpack.c.l.b16 %v30
    %v67 = vunpack.c.l.b16 %v31
    %v68 = vunpack.c.l.b16 %v32
    %v69 = vunpack.c.l.b16 %v33
    %v70 = vunpack.c.l.b16 %v34
    %v71 = vunpack.c.l.b16 %v35
    %v72 = vpack.c.b16 %v65, %v64
    %v73 = vpack.c.b16 %v67, %v66
    %v74 = vpack.c.b16 %v69, %v68
    %v75 = vpack.c.b16 %v71, %v70
    %vm76 = vcmask 523264
    %v78 = vsel %vm76, %v72, 0
    %v81 = vsel %vm76, %v73, 0
    %v84 = vsel %vm76, %v74, 0
    %v87 = vsel %vm76, %v75, 0
    %89 = vmatprep.subr.bf16.mxu0 0
    %90 = vmatpush1.bf16.msra.mxu0 0
    %91 = vmatprep.subr.bf16.mxu0 0
    %92 = vmatpush1.bf16.msra.mxu0 0
    %93 = vmatprep.subr.bf16.mxu0 0
    %94 = vmatpush1.bf16.msra.mxu0 0
    %95 = vmatprep.subr.bf16.mxu0 0
    %96 = vmatpush1.bf16.msra.mxu0 0
    %97 = vmatprep.subr.bf16.mxu0 0
    %98 = vmatpush1.bf16.msra.mxu0 %v55
    %99 = vmatprep.subr.bf16.mxu0 0
    %100 = vmatpush1.bf16.msra.mxu0 %v54
    %101 = vmatprep.subr.bf16.mxu0 0
    %102 = vmatpush1.bf16.msra.mxu0 %v53
    %103 = vmatprep.subr.bf16.mxu0 0
    %104 = vmatpush1.bf16.msra.mxu0 %v52
    %105 = vmatprep.subr.bf16.mxu0 0
    %106 = vmatpush2.bf16.msra.mxu0 0
    %107 = vmatprep.subr.bf16.mxu0 0
    %108 = vmatpush2.bf16.msra.mxu0 0
    %109 = vmatprep.subr.bf16.mxu0 0
    %110 = vmatpush2.bf16.msra.mxu0 0
    %111 = vmatprep.subr.bf16.mxu0 0
    %112 = vmatpush2.bf16.msra.mxu0 0
    %113 = vmatprep.subr.bf16.mxu0 0
    %114 = vmatpush2.bf16.msra.mxu0 0
    %115 = vmatprep.subr.bf16.mxu0 0
    %116 = vmatpush2.bf16.msra.mxu0 0
    %117 = vmatprep.subr.bf16.mxu0 0
    %118 = vmatpush2.bf16.msra.mxu0 0
    %119 = vmatprep.subr.bf16.mxu0 0
    %120 = vmatpush2.bf16.msra.mxu0 0
    %121 = vmatprep.mubr.bf16.mxu0 0
    %122 = vmatmul.mubr.bf16.gmra.mxu0 %v78
    %v123 = vpop.f32.mrf.mxu0
    %v124 = vadd.f32 0.0, %v123
    %v125 = vpop.f32.mrf.mxu0
    %v126 = vpop.f32.mrf.mxu0
    %v127 = vadd.f32 0.0, %v126
    %v128 = vpop.f32.mrf.mxu0
    %129 = vmatprep.mubr.bf16.mxu0 0
    %130 = vmatmul.mubr.bf16.gmra.mxu0 %v81
    %v131 = vpop.f32.mrf.mxu0
    %v132 = vadd.f32 0.0, %v131
    %v133 = vpop.f32.mrf.mxu0
    %v134 = vpop.f32.mrf.mxu0
    %v135 = vadd.f32 0.0, %v134
    %v136 = vpop.f32.mrf.mxu0
    %137 = vmatprep.mubr.bf16.mxu0 0
    %138 = vmatmul.mubr.bf16.gmra.mxu0 %v84
    %v139 = vpop.f32.mrf.mxu0
    %v140 = vadd.f32 0.0, %v139
    %v141 = vpop.f32.mrf.mxu0
    %v142 = vpop.f32.mrf.mxu0
    %v143 = vadd.f32 0.0, %v142
    %v144 = vpop.f32.mrf.mxu0
    %145 = vmatprep.mubr.bf16.mxu0 0
    %146 = vmatmul.mubr.bf16.gmra.mxu0 %v87
    %v147 = vpop.f32.mrf.mxu0
    %v148 = vadd.f32 0.0, %v147
    %v149 = vpop.f32.mrf.mxu0
    %v150 = vpop.f32.mrf.mxu0
    %v151 = vadd.f32 0.0, %v150
    %v152 = vpop.f32.mrf.mxu0
    %153 = vdwg.mxu0
    %155 = vset.pattern.permute.xlu0 0
    %156 = vperm.xlu0 %155, %v36
    %v157 = vpop.permute.xlu0 %156
    %160 = vset.pattern.permute.xlu0 0
    %161 = vperm.xlu0 %160, %v37
    %v162 = vpop.permute.xlu0 %161
    %165 = vset.pattern.permute.xlu0 0
    %166 = vperm.xlu0 %165, %v38
    %v167 = vpop.permute.xlu0 %166
    %170 = vset.pattern.permute.xlu0 0
    %171 = vperm.xlu0 %170, %v39
    %v172 = vpop.permute.xlu0 %171
    %175 = vset.pattern.permute.xlu0 0
    %176 = vperm.xlu0 %175, %v40
    %v177 = vpop.permute.xlu0 %176
    %180 = vset.pattern.permute.xlu0 0
    %181 = vperm.xlu0 %180, %v41
    %v182 = vpop.permute.xlu0 %181
    %185 = vset.pattern.permute.xlu0 0
    %186 = vperm.xlu0 %185, %v42
    %v187 = vpop.permute.xlu0 %186
    %190 = vset.pattern.permute.xlu0 0
    %191 = vperm.xlu0 %190, %v43
    %v192 = vpop.permute.xlu0 %191
    %v194 = vmul.f32 %v124, %v157
    %v195 = vmul.f32 %v127, %v162
    %v196 = vmul.f32 %v132, %v167
    %v197 = vmul.f32 %v135, %v172
    %v198 = vmul.f32 %v140, %v177
    %v199 = vmul.f32 %v143, %v182
    %v200 = vmul.f32 %v148, %v187
    %v201 = vmul.f32 %v151, %v192
    %v202 = vpack.c.bf16 %v195, %v194
    %v203 = vpack.c.bf16 %v197, %v196
    %v204 = vpack.c.bf16 %v199, %v198
    %v205 = vpack.c.bf16 %v201, %v200
    %210 = vrot.lane.b32.xlu0 %v52, 32
    %v211 = vpop.permute.xlu0 %210
    %212 = vrot.lane.b32.xlu0 %v53, 32
    %v213 = vpop.permute.xlu0 %212
    %214 = vrot.lane.b32.xlu0 %v54, 32
    %v215 = vpop.permute.xlu0 %214
    %216 = vrot.lane.b32.xlu0 %v55, 32
    %v217 = vpop.permute.xlu0 %216
    %vm218 = vcmask 261120
    %v221 = vsel %vm218, %v202, %v211
    %v224 = vsel %vm218, %v203, %v213
    %v227 = vsel %vm218, %v204, %v215
    %v230 = vsel %vm218, %v205, %v217
    %v231 = vld [vmem:[%s3] sm:$0xf]
    %v232 = vld [vmem:[%s3 + $0x4] sm:$0xf]
    %v233 = vld [vmem:[%s3 + $0x8] sm:$0xf]
    %v234 = vld [vmem:[%s3 + $0xc] sm:$0xf]
    %v235 = vld [vmem:[%s3 + $0x10] sm:$0xf]
    %v236 = vld [vmem:[%s3 + $0x14] sm:$0xf]
    %v237 = vld [vmem:[%s3 + $0x18] sm:$0xf]
    %v238 = vld [vmem:[%s3 + $0x1c] sm:$0xf]
    %v239 = vld [vmem:[%s4] sm:$0x1]
    %v241 = vlaneseq
    %v242 = vshrl.u32 %v241, 7
    %v243 = vsub.s32 0, %v242
    %v244 = vrot.slane %v239, %v243
    %v254 = vunpack.c.l.b16 %v231
    %v255 = vunpack.c.l.b16 %v232
    %v256 = vunpack.c.l.b16 %v233
    %v257 = vunpack.c.l.b16 %v234
    %v258 = vunpack.c.l.b16 %v235
    %v259 = vunpack.c.l.b16 %v236
    %v260 = vunpack.c.l.b16 %v237
    %v261 = vunpack.c.l.b16 %v238
    %v262 = vpack.c.b16 %v255, %v254
    %v263 = vpack.c.b16 %v257, %v256
    %v264 = vpack.c.b16 %v259, %v258
    %v265 = vpack.c.b16 %v261, %v260
    %v270 = vsel %vm76, %v221, 0
    %v272 = vsel %vm76, %v224, 0
    %v274 = vsel %vm76, %v227, 0
    %v276 = vsel %vm76, %v230, 0
    %278 = vmatprep.subr.bf16.mxu0 0
    %279 = vmatpush1.bf16.msra.mxu0 0
    %280 = vmatprep.subr.bf16.mxu0 0
    %281 = vmatpush1.bf16.msra.mxu0 0
    %282 = vmatprep.subr.bf16.mxu0 0
    %283 = vmatpush1.bf16.msra.mxu0 0
    %284 = vmatprep.subr.bf16.mxu0 0
    %285 = vmatpush1.bf16.msra.mxu0 0
    %286 = vmatprep.subr.bf16.mxu0 0
    %287 = vmatpush1.bf16.msra.mxu0 %v265
    %288 = vmatprep.subr.bf16.mxu0 0
    %289 = vmatpush1.bf16.msra.mxu0 %v264
    %290 = vmatprep.subr.bf16.mxu0 0
    %291 = vmatpush1.bf16.msra.mxu0 %v263
    %292 = vmatprep.subr.bf16.mxu0 0
    %293 = vmatpush1.bf16.msra.mxu0 %v262
    %294 = vmatprep.subr.bf16.mxu0 0
    %295 = vmatpush2.bf16.msra.mxu0 0
    %296 = vmatprep.subr.bf16.mxu0 0
    %297 = vmatpush2.bf16.msra.mxu0 0
    %298 = vmatprep.subr.bf16.mxu0 0
    %299 = vmatpush2.bf16.msra.mxu0 0
    %300 = vmatprep.subr.bf16.mxu0 0
    %301 = vmatpush2.bf16.msra.mxu0 0
    %302 = vmatprep.subr.bf16.mxu0 0
    %303 = vmatpush2.bf16.msra.mxu0 0
    %304 = vmatprep.subr.bf16.mxu0 0
    %305 = vmatpush2.bf16.msra.mxu0 0
    %306 = vmatprep.subr.bf16.mxu0 0
    %307 = vmatpush2.bf16.msra.mxu0 0
    %308 = vmatprep.subr.bf16.mxu0 0
    %309 = vmatpush2.bf16.msra.mxu0 0
    %310 = vmatprep.mubr.bf16.mxu0 0
    %311 = vmatmul.mubr.bf16.gmra.mxu0 %v270
    %v312 = vpop.f32.mrf.mxu0
    %v313 = vadd.f32 %v244, %v312
    %v314 = vpop.f32.mrf.mxu0
    %v315 = vpop.f32.mrf.mxu0
    %v316 = vadd.f32 %v244, %v315
    %v317 = vpop.f32.mrf.mxu0
    %318 = vmatprep.mubr.bf16.mxu0 0
    %319 = vmatmul.mubr.bf16.gmra.mxu0 %v272
    %v320 = vpop.f32.mrf.mxu0
    %v321 = vadd.f32 %v244, %v320
    %v322 = vpop.f32.mrf.mxu0
    %v323 = vpop.f32.mrf.mxu0
    %v324 = vadd.f32 %v244, %v323
    %v325 = vpop.f32.mrf.mxu0
    %326 = vmatprep.mubr.bf16.mxu0 0
    %327 = vmatmul.mubr.bf16.gmra.mxu0 %v274
    %v328 = vpop.f32.mrf.mxu0
    %v329 = vadd.f32 %v244, %v328
    %v330 = vpop.f32.mrf.mxu0
    %v331 = vpop.f32.mrf.mxu0
    %v332 = vadd.f32 %v244, %v331
    %v333 = vpop.f32.mrf.mxu0
    %334 = vmatprep.mubr.bf16.mxu0 0
    %335 = vmatmul.mubr.bf16.gmra.mxu0 %v276
    %v336 = vpop.f32.mrf.mxu0
    %v337 = vadd.f32 %v244, %v336
    %v338 = vpop.f32.mrf.mxu0
    %v339 = vpop.f32.mrf.mxu0
    %v340 = vadd.f32 %v244, %v339
    %v341 = vpop.f32.mrf.mxu0
    %342 = vdwg.mxu0
    %v343 = vmax.f32 %v313, 0.0
    %v344 = vmax.f32 %v316, 0.0
    %v345 = vmax.f32 %v321, 0.0
    %v346 = vmax.f32 %v324, 0.0
    %v347 = vmax.f32 %v329, 0.0
    %v348 = vmax.f32 %v332, 0.0
    %v349 = vmax.f32 %v337, 0.0
    %v350 = vmax.f32 %v340, 0.0
    %v351 = vpack.c.bf16 %v344, %v343
    %v352 = vpack.c.bf16 %v346, %v345
    %v353 = vpack.c.bf16 %v348, %v347
    %v354 = vpack.c.bf16 %v350, %v349
    %355 = vmatprep.subr.bf16.mxu0 0
    %356 = vmatpush1.bf16.msra.mxu0 0
    %357 = vmatprep.subr.bf16.mxu0 0
    %358 = vmatpush1.bf16.msra.mxu0 0
    %359 = vmatprep.subr.bf16.mxu0 0
    %360 = vmatpush1.bf16.msra.mxu0 0
    %361 = vmatprep.subr.bf16.mxu0 0
    %362 = vmatpush1.bf16.msra.mxu0 0
    %363 = vmatprep.subr.bf16.mxu0 0
    %364 = vmatpush1.bf16.msra.mxu0 %v354
    %365 = vmatprep.subr.bf16.mxu0 0
    %366 = vmatpush1.bf16.msra.mxu0 %v353
    %367 = vmatprep.subr.bf16.mxu0 0
    %368 = vmatpush1.bf16.msra.mxu0 %v352
    %369 = vmatprep.subr.bf16.mxu0 0
    %370 = vmatpush1.bf16.msra.mxu0 %v351
    %371 = vmatprep.subr.bf16.mxu0 0
    %372 = vmatpush2.bf16.msra.mxu0 0
    %373 = vmatprep.subr.bf16.mxu0 0
    %374 = vmatpush2.bf16.msra.mxu0 0
    %375 = vmatprep.subr.bf16.mxu0 0
    %376 = vmatpush2.bf16.msra.mxu0 0
    %377 = vmatprep.subr.bf16.mxu0 0
    %378 = vmatpush2.bf16.msra.mxu0 0
    %379 = vmatprep.subr.bf16.mxu0 0
    %380 = vmatpush2.bf16.msra.mxu0 0
    %381 = vmatprep.subr.bf16.mxu0 0
    %382 = vmatpush2.bf16.msra.mxu0 0
    %383 = vmatprep.subr.bf16.mxu0 0
    %384 = vmatpush2.bf16.msra.mxu0 0
    %385 = vmatprep.subr.bf16.mxu0 0
    %386 = vmatpush2.bf16.msra.mxu0 0
    %387 = vmatprep.mubr.bf16.mxu0 0
    %388 = vmatmul.mubr.bf16.gmra.mxu0 %v78
    %v389 = vpop.f32.mrf.mxu0
    %v390 = vadd.f32 0.0, %v389
    %v391 = vpop.f32.mrf.mxu0
    %v392 = vpop.f32.mrf.mxu0
    %v393 = vadd.f32 0.0, %v392
    %v394 = vpop.f32.mrf.mxu0
    %395 = vmatprep.mubr.bf16.mxu0 0
    %396 = vmatmul.mubr.bf16.gmra.mxu0 %v81
    %v397 = vpop.f32.mrf.mxu0
    %v398 = vadd.f32 0.0, %v397
    %v399 = vpop.f32.mrf.mxu0
    %v400 = vpop.f32.mrf.mxu0
    %v401 = vadd.f32 0.0, %v400
    %v402 = vpop.f32.mrf.mxu0
    %403 = vmatprep.mubr.bf16.mxu0 0
    %404 = vmatmul.mubr.bf16.gmra.mxu0 %v84
    %v405 = vpop.f32.mrf.mxu0
    %v406 = vadd.f32 0.0, %v405
    %v407 = vpop.f32.mrf.mxu0
    %v408 = vpop.f32.mrf.mxu0
    %v409 = vadd.f32 0.0, %v408
    %v410 = vpop.f32.mrf.mxu0
    %411 = vmatprep.mubr.bf16.mxu0 0
    %412 = vmatmul.mubr.bf16.gmra.mxu0 %v87
    %v413 = vpop.f32.mrf.mxu0
    %v414 = vadd.f32 0.0, %v413
    %v415 = vpop.f32.mrf.mxu0
    %v416 = vpop.f32.mrf.mxu0
    %v417 = vadd.f32 0.0, %v416
    %v418 = vpop.f32.mrf.mxu0
    %419 = vdwg.mxu0
    %v420 = vmul.f32 %v390, %v157
    %v421 = vmul.f32 %v393, %v162
    %v422 = vmul.f32 %v398, %v167
    %v423 = vmul.f32 %v401, %v172
    %v424 = vmul.f32 %v406, %v177
    %v425 = vmul.f32 %v409, %v182
    %v426 = vmul.f32 %v414, %v187
    %v427 = vmul.f32 %v417, %v192
    %v428 = vpack.c.bf16 %v421, %v420
    %v429 = vpack.c.bf16 %v423, %v422
    %v430 = vpack.c.bf16 %v425, %v424
    %v431 = vpack.c.bf16 %v427, %v426
    %436 = vrot.lane.b32.xlu0 %v351, 32
    %v437 = vpop.permute.xlu0 %436
    %438 = vrot.lane.b32.xlu0 %v352, 32
    %v439 = vpop.permute.xlu0 %438
    %440 = vrot.lane.b32.xlu0 %v353, 32
    %v441 = vpop.permute.xlu0 %440
    %442 = vrot.lane.b32.xlu0 %v354, 32
    %v443 = vpop.permute.xlu0 %442
    %v446 = vsel %vm218, %v428, %v437
    %v449 = vsel %vm218, %v429, %v439
    %v452 = vsel %vm218, %v430, %v441
    %v455 = vsel %vm218, %v431, %v443
    %s456 = scalar_lea.vmem %s3, 32
    %v457 = vld [vmem:[%s456] sm:$0xf]
    %v458 = vld [vmem:[%s456 + $0x4] sm:$0xf]
    %v459 = vld [vmem:[%s456 + $0x8] sm:$0xf]
    %v460 = vld [vmem:[%s456 + $0xc] sm:$0xf]
    %v461 = vld [vmem:[%s456 + $0x10] sm:$0xf]
    %v462 = vld [vmem:[%s456 + $0x14] sm:$0xf]
    %v463 = vld [vmem:[%s456 + $0x18] sm:$0xf]
    %v464 = vld [vmem:[%s456 + $0x1c] sm:$0xf]
    %s465 = scalar_lea.vmem %s4, 1
    %v466 = vld [vmem:[%s465] sm:$0x1]
    %v468 = vlaneseq
    %v469 = vshrl.u32 %v468, 7
    %v470 = vsub.s32 0, %v469
    %v471 = vrot.slane %v466, %v470
    %v481 = vunpack.c.l.b16 %v457
    %v482 = vunpack.c.l.b16 %v458
    %v483 = vunpack.c.l.b16 %v459
    %v484 = vunpack.c.l.b16 %v460
    %v485 = vunpack.c.l.b16 %v461
    %v486 = vunpack.c.l.b16 %v462
    %v487 = vunpack.c.l.b16 %v463
    %v488 = vunpack.c.l.b16 %v464
    %v489 = vpack.c.b16 %v482, %v481
    %v490 = vpack.c.b16 %v484, %v483
    %v491 = vpack.c.b16 %v486, %v485
    %v492 = vpack.c.b16 %v488, %v487
    %v497 = vsel %vm76, %v446, 0
    %v499 = vsel %vm76, %v449, 0
    %v501 = vsel %vm76, %v452, 0
    %v503 = vsel %vm76, %v455, 0
    %505 = vmatprep.subr.bf16.mxu0 0
    %506 = vmatpush1.bf16.msra.mxu0 0
    %507 = vmatprep.subr.bf16.mxu0 0
    %508 = vmatpush1.bf16.msra.mxu0 0
    %509 = vmatprep.subr.bf16.mxu0 0
    %510 = vmatpush1.bf16.msra.mxu0 0
    %511 = vmatprep.subr.bf16.mxu0 0
    %512 = vmatpush1.bf16.msra.mxu0 0
    %513 = vmatprep.subr.bf16.mxu0 0
    %514 = vmatpush1.bf16.msra.mxu0 %v492
    %515 = vmatprep.subr.bf16.mxu0 0
    %516 = vmatpush1.bf16.msra.mxu0 %v491
    %517 = vmatprep.subr.bf16.mxu0 0
    %518 = vmatpush1.bf16.msra.mxu0 %v490
    %519 = vmatprep.subr.bf16.mxu0 0
    %520 = vmatpush1.bf16.msra.mxu0 %v489
    %521 = vmatprep.subr.bf16.mxu0 0
    %522 = vmatpush2.bf16.msra.mxu0 0
    %523 = vmatprep.subr.bf16.mxu0 0
    %524 = vmatpush2.bf16.msra.mxu0 0
    %525 = vmatprep.subr.bf16.mxu0 0
    %526 = vmatpush2.bf16.msra.mxu0 0
    %527 = vmatprep.subr.bf16.mxu0 0
    %528 = vmatpush2.bf16.msra.mxu0 0
    %529 = vmatprep.subr.bf16.mxu0 0
    %530 = vmatpush2.bf16.msra.mxu0 0
    %531 = vmatprep.subr.bf16.mxu0 0
    %532 = vmatpush2.bf16.msra.mxu0 0
    %533 = vmatprep.subr.bf16.mxu0 0
    %534 = vmatpush2.bf16.msra.mxu0 0
    %535 = vmatprep.subr.bf16.mxu0 0
    %536 = vmatpush2.bf16.msra.mxu0 0
    %537 = vmatprep.mubr.bf16.mxu0 0
    %538 = vmatmul.mubr.bf16.gmra.mxu0 %v497
    %v539 = vpop.f32.mrf.mxu0
    %v540 = vadd.f32 %v471, %v539
    %v541 = vpop.f32.mrf.mxu0
    %v542 = vpop.f32.mrf.mxu0
    %v543 = vadd.f32 %v471, %v542
    %v544 = vpop.f32.mrf.mxu0
    %545 = vmatprep.mubr.bf16.mxu0 0
    %546 = vmatmul.mubr.bf16.gmra.mxu0 %v499
    %v547 = vpop.f32.mrf.mxu0
    %v548 = vadd.f32 %v471, %v547
    %v549 = vpop.f32.mrf.mxu0
    %v550 = vpop.f32.mrf.mxu0
    %v551 = vadd.f32 %v471, %v550
    %v552 = vpop.f32.mrf.mxu0
    %553 = vmatprep.mubr.bf16.mxu0 0
    %554 = vmatmul.mubr.bf16.gmra.mxu0 %v501
    %v555 = vpop.f32.mrf.mxu0
    %v556 = vadd.f32 %v471, %v555
    %v557 = vpop.f32.mrf.mxu0
    %v558 = vpop.f32.mrf.mxu0
    %v559 = vadd.f32 %v471, %v558
    %v560 = vpop.f32.mrf.mxu0
    %561 = vmatprep.mubr.bf16.mxu0 0
    %562 = vmatmul.mubr.bf16.gmra.mxu0 %v503
    %v563 = vpop.f32.mrf.mxu0
    %v564 = vadd.f32 %v471, %v563
    %v565 = vpop.f32.mrf.mxu0
    %v566 = vpop.f32.mrf.mxu0
    %v567 = vadd.f32 %v471, %v566
    %v568 = vpop.f32.mrf.mxu0
    %569 = vdwg.mxu0
    %v570 = vmax.f32 %v540, 0.0
    %v571 = vmax.f32 %v543, 0.0
    %v572 = vmax.f32 %v548, 0.0
    %v573 = vmax.f32 %v551, 0.0
    %v574 = vmax.f32 %v556, 0.0
    %v575 = vmax.f32 %v559, 0.0
    %v576 = vmax.f32 %v564, 0.0
    %v577 = vmax.f32 %v567, 0.0
    %v578 = vpack.c.bf16 %v571, %v570
    %v579 = vpack.c.bf16 %v573, %v572
    %v580 = vpack.c.bf16 %v575, %v574
    %v581 = vpack.c.bf16 %v577, %v576
    %582 = vmatprep.subr.bf16.mxu0 0
    %583 = vmatpush1.bf16.msra.mxu0 0
    %584 = vmatprep.subr.bf16.mxu0 0
    %585 = vmatpush1.bf16.msra.mxu0 0
    %586 = vmatprep.subr.bf16.mxu0 0
    %587 = vmatpush1.bf16.msra.mxu0 0
    %588 = vmatprep.subr.bf16.mxu0 0
    %589 = vmatpush1.bf16.msra.mxu0 0
    %590 = vmatprep.subr.bf16.mxu0 0
    %591 = vmatpush1.bf16.msra.mxu0 %v581
    %592 = vmatprep.subr.bf16.mxu0 0
    %593 = vmatpush1.bf16.msra.mxu0 %v580
    %594 = vmatprep.subr.bf16.mxu0 0
    %595 = vmatpush1.bf16.msra.mxu0 %v579
    %596 = vmatprep.subr.bf16.mxu0 0
    %597 = vmatpush1.bf16.msra.mxu0 %v578
    %598 = vmatprep.subr.bf16.mxu0 0
    %599 = vmatpush2.bf16.msra.mxu0 0
    %600 = vmatprep.subr.bf16.mxu0 0
    %601 = vmatpush2.bf16.msra.mxu0 0
    %602 = vmatprep.subr.bf16.mxu0 0
    %603 = vmatpush2.bf16.msra.mxu0 0
    %604 = vmatprep.subr.bf16.mxu0 0
    %605 = vmatpush2.bf16.msra.mxu0 0
    %606 = vmatprep.subr.bf16.mxu0 0
    %607 = vmatpush2.bf16.msra.mxu0 0
    %608 = vmatprep.subr.bf16.mxu0 0
    %609 = vmatpush2.bf16.msra.mxu0 0
    %610 = vmatprep.subr.bf16.mxu0 0
    %611 = vmatpush2.bf16.msra.mxu0 0
    %612 = vmatprep.subr.bf16.mxu0 0
    %613 = vmatpush2.bf16.msra.mxu0 0
    %614 = vmatprep.mubr.bf16.mxu0 0
    %615 = vmatmul.mubr.bf16.gmra.mxu0 %v78
    %v616 = vpop.f32.mrf.mxu0
    %v617 = vadd.f32 0.0, %v616
    %v618 = vpop.f32.mrf.mxu0
    %v619 = vpop.f32.mrf.mxu0
    %v620 = vadd.f32 0.0, %v619
    %v621 = vpop.f32.mrf.mxu0
    %622 = vmatprep.mubr.bf16.mxu0 0
    %623 = vmatmul.mubr.bf16.gmra.mxu0 %v81
    %v624 = vpop.f32.mrf.mxu0
    %v625 = vadd.f32 0.0, %v624
    %v626 = vpop.f32.mrf.mxu0
    %v627 = vpop.f32.mrf.mxu0
    %v628 = vadd.f32 0.0, %v627
    %v629 = vpop.f32.mrf.mxu0
    %630 = vmatprep.mubr.bf16.mxu0 0
    %631 = vmatmul.mubr.bf16.gmra.mxu0 %v84
    %v632 = vpop.f32.mrf.mxu0
    %v633 = vadd.f32 0.0, %v632
    %v634 = vpop.f32.mrf.mxu0
    %v635 = vpop.f32.mrf.mxu0
    %v636 = vadd.f32 0.0, %v635
    %v637 = vpop.f32.mrf.mxu0
    %638 = vmatprep.mubr.bf16.mxu0 0
    %639 = vmatmul.mubr.bf16.gmra.mxu0 %v87
    %v640 = vpop.f32.mrf.mxu0
    %v641 = vadd.f32 0.0, %v640
    %v642 = vpop.f32.mrf.mxu0
    %v643 = vpop.f32.mrf.mxu0
    %v644 = vadd.f32 0.0, %v643
    %v645 = vpop.f32.mrf.mxu0
    %646 = vdwg.mxu0
    %v647 = vmul.f32 %v617, %v157
    %v648 = vmul.f32 %v620, %v162
    %v649 = vmul.f32 %v625, %v167
    %v650 = vmul.f32 %v628, %v172
    %v651 = vmul.f32 %v633, %v177
    %v652 = vmul.f32 %v636, %v182
    %v653 = vmul.f32 %v641, %v187
    %v654 = vmul.f32 %v644, %v192
    %v655 = vpack.c.bf16 %v648, %v647
    %v656 = vpack.c.bf16 %v650, %v649
    %v657 = vpack.c.bf16 %v652, %v651
    %v658 = vpack.c.bf16 %v654, %v653
    %663 = vrot.lane.b32.xlu0 %v578, 32
    %v664 = vpop.permute.xlu0 %663
    %665 = vrot.lane.b32.xlu0 %v579, 32
    %v666 = vpop.permute.xlu0 %665
    %667 = vrot.lane.b32.xlu0 %v580, 32
    %v668 = vpop.permute.xlu0 %667
    %669 = vrot.lane.b32.xlu0 %v581, 32
    %v670 = vpop.permute.xlu0 %669
    %v673 = vsel %vm218, %v655, %v664
    %v676 = vsel %vm218, %v656, %v666
    %v679 = vsel %vm218, %v657, %v668
    %v682 = vsel %vm218, %v658, %v670
    %s683 = scalar_lea.vmem %s3, 64
    %v684 = vld [vmem:[%s683] sm:$0xf]
    %v685 = vld [vmem:[%s683 + $0x4] sm:$0xf]
    %v686 = vld [vmem:[%s683 + $0x8] sm:$0xf]
    %v687 = vld [vmem:[%s683 + $0xc] sm:$0xf]
    %v688 = vld [vmem:[%s683 + $0x10] sm:$0xf]
    %v689 = vld [vmem:[%s683 + $0x14] sm:$0xf]
    %v690 = vld [vmem:[%s683 + $0x18] sm:$0xf]
    %v691 = vld [vmem:[%s683 + $0x1c] sm:$0xf]
    %s692 = scalar_lea.vmem %s4, 2
    %v693 = vld [vmem:[%s692] sm:$0x1]
    %v695 = vlaneseq
    %v696 = vshrl.u32 %v695, 7
    %v697 = vsub.s32 0, %v696
    %v698 = vrot.slane %v693, %v697
    %v708 = vunpack.c.l.b16 %v684
    %v709 = vunpack.c.l.b16 %v685
    %v710 = vunpack.c.l.b16 %v686
    %v711 = vunpack.c.l.b16 %v687
    %v712 = vunpack.c.l.b16 %v688
    %v713 = vunpack.c.l.b16 %v689
    %v714 = vunpack.c.l.b16 %v690
    %v715 = vunpack.c.l.b16 %v691
    %v716 = vpack.c.b16 %v709, %v708
    %v717 = vpack.c.b16 %v711, %v710
    %v718 = vpack.c.b16 %v713, %v712
    %v719 = vpack.c.b16 %v715, %v714
    %v724 = vsel %vm76, %v673, 0
    %v726 = vsel %vm76, %v676, 0
    %v728 = vsel %vm76, %v679, 0
    %v730 = vsel %vm76, %v682, 0
    %732 = vmatprep.subr.bf16.mxu0 0
    %733 = vmatpush1.bf16.msra.mxu0 0
    %734 = vmatprep.subr.bf16.mxu0 0
    %735 = vmatpush1.bf16.msra.mxu0 0
    %736 = vmatprep.subr.bf16.mxu0 0
    %737 = vmatpush1.bf16.msra.mxu0 0
    %738 = vmatprep.subr.bf16.mxu0 0
    %739 = vmatpush1.bf16.msra.mxu0 0
    %740 = vmatprep.subr.bf16.mxu0 0
    %741 = vmatpush1.bf16.msra.mxu0 %v719
    %742 = vmatprep.subr.bf16.mxu0 0
    %743 = vmatpush1.bf16.msra.mxu0 %v718
    %744 = vmatprep.subr.bf16.mxu0 0
    %745 = vmatpush1.bf16.msra.mxu0 %v717
    %746 = vmatprep.subr.bf16.mxu0 0
    %747 = vmatpush1.bf16.msra.mxu0 %v716
    %748 = vmatprep.subr.bf16.mxu0 0
    %749 = vmatpush2.bf16.msra.mxu0 0
    %750 = vmatprep.subr.bf16.mxu0 0
    %751 = vmatpush2.bf16.msra.mxu0 0
    %752 = vmatprep.subr.bf16.mxu0 0
    %753 = vmatpush2.bf16.msra.mxu0 0
    %754 = vmatprep.subr.bf16.mxu0 0
    %755 = vmatpush2.bf16.msra.mxu0 0
    %756 = vmatprep.subr.bf16.mxu0 0
    %757 = vmatpush2.bf16.msra.mxu0 0
    %758 = vmatprep.subr.bf16.mxu0 0
    %759 = vmatpush2.bf16.msra.mxu0 0
    %760 = vmatprep.subr.bf16.mxu0 0
    %761 = vmatpush2.bf16.msra.mxu0 0
    %762 = vmatprep.subr.bf16.mxu0 0
    %763 = vmatpush2.bf16.msra.mxu0 0
    %764 = vmatprep.mubr.bf16.mxu0 0
    %765 = vmatmul.mubr.bf16.gmra.mxu0 %v724
    %v766 = vpop.f32.mrf.mxu0
    %v767 = vadd.f32 %v698, %v766
    %v768 = vpop.f32.mrf.mxu0
    %v769 = vpop.f32.mrf.mxu0
    %v770 = vadd.f32 %v698, %v769
    %v771 = vpop.f32.mrf.mxu0
    %772 = vmatprep.mubr.bf16.mxu0 0
    %773 = vmatmul.mubr.bf16.gmra.mxu0 %v726
    %v774 = vpop.f32.mrf.mxu0
    %v775 = vadd.f32 %v698, %v774
    %v776 = vpop.f32.mrf.mxu0
    %v777 = vpop.f32.mrf.mxu0
    %v778 = vadd.f32 %v698, %v777
    %v779 = vpop.f32.mrf.mxu0
    %780 = vmatprep.mubr.bf16.mxu0 0
    %781 = vmatmul.mubr.bf16.gmra.mxu0 %v728
    %v782 = vpop.f32.mrf.mxu0
    %v783 = vadd.f32 %v698, %v782
    %v784 = vpop.f32.mrf.mxu0
    %v785 = vpop.f32.mrf.mxu0
    %v786 = vadd.f32 %v698, %v785
    %v787 = vpop.f32.mrf.mxu0
    %788 = vmatprep.mubr.bf16.mxu0 0
    %789 = vmatmul.mubr.bf16.gmra.mxu0 %v730
    %v790 = vpop.f32.mrf.mxu0
    %v791 = vadd.f32 %v698, %v790
    %v792 = vpop.f32.mrf.mxu0
    %v793 = vpop.f32.mrf.mxu0
    %v794 = vadd.f32 %v698, %v793
    %v795 = vpop.f32.mrf.mxu0
    %796 = vdwg.mxu0
    %v797 = vmax.f32 %v767, 0.0
    %v798 = vmax.f32 %v770, 0.0
    %v799 = vmax.f32 %v775, 0.0
    %v800 = vmax.f32 %v778, 0.0
    %v801 = vmax.f32 %v783, 0.0
    %v802 = vmax.f32 %v786, 0.0
    %v803 = vmax.f32 %v791, 0.0
    %v804 = vmax.f32 %v794, 0.0
    %v805 = vpack.c.bf16 %v798, %v797
    %v806 = vpack.c.bf16 %v800, %v799
    %v807 = vpack.c.bf16 %v802, %v801
    %v808 = vpack.c.bf16 %v804, %v803
    %809 = vmatprep.subr.bf16.mxu0 0
    %810 = vmatpush1.bf16.msra.mxu0 0
    %811 = vmatprep.subr.bf16.mxu0 0
    %812 = vmatpush1.bf16.msra.mxu0 0
    %813 = vmatprep.subr.bf16.mxu0 0
    %814 = vmatpush1.bf16.msra.mxu0 0
    %815 = vmatprep.subr.bf16.mxu0 0
    %816 = vmatpush1.bf16.msra.mxu0 0
    %817 = vmatprep.subr.bf16.mxu0 0
    %818 = vmatpush1.bf16.msra.mxu0 %v808
    %819 = vmatprep.subr.bf16.mxu0 0
    %820 = vmatpush1.bf16.msra.mxu0 %v807
    %821 = vmatprep.subr.bf16.mxu0 0
    %822 = vmatpush1.bf16.msra.mxu0 %v806
    %823 = vmatprep.subr.bf16.mxu0 0
    %824 = vmatpush1.bf16.msra.mxu0 %v805
    %825 = vmatprep.subr.bf16.mxu0 0
    %826 = vmatpush2.bf16.msra.mxu0 0
    %827 = vmatprep.subr.bf16.mxu0 0
    %828 = vmatpush2.bf16.msra.mxu0 0
    %829 = vmatprep.subr.bf16.mxu0 0
    %830 = vmatpush2.bf16.msra.mxu0 0
    %831 = vmatprep.subr.bf16.mxu0 0
    %832 = vmatpush2.bf16.msra.mxu0 0
    %833 = vmatprep.subr.bf16.mxu0 0
    %834 = vmatpush2.bf16.msra.mxu0 0
    %835 = vmatprep.subr.bf16.mxu0 0
    %836 = vmatpush2.bf16.msra.mxu0 0
    %837 = vmatprep.subr.bf16.mxu0 0
    %838 = vmatpush2.bf16.msra.mxu0 0
    %839 = vmatprep.subr.bf16.mxu0 0
    %840 = vmatpush2.bf16.msra.mxu0 0
    %841 = vmatprep.mubr.bf16.mxu0 0
    %842 = vmatmul.mubr.bf16.gmra.mxu0 %v78
    %v843 = vpop.f32.mrf.mxu0
    %v844 = vadd.f32 0.0, %v843
    %v845 = vpop.f32.mrf.mxu0
    %v846 = vpop.f32.mrf.mxu0
    %v847 = vadd.f32 0.0, %v846
    %v848 = vpop.f32.mrf.mxu0
    %849 = vmatprep.mubr.bf16.mxu0 0
    %850 = vmatmul.mubr.bf16.gmra.mxu0 %v81
    %v851 = vpop.f32.mrf.mxu0
    %v852 = vadd.f32 0.0, %v851
    %v853 = vpop.f32.mrf.mxu0
    %v854 = vpop.f32.mrf.mxu0
    %v855 = vadd.f32 0.0, %v854
    %v856 = vpop.f32.mrf.mxu0
    %857 = vmatprep.mubr.bf16.mxu0 0
    %858 = vmatmul.mubr.bf16.gmra.mxu0 %v84
    %v859 = vpop.f32.mrf.mxu0
    %v860 = vadd.f32 0.0, %v859
    %v861 = vpop.f32.mrf.mxu0
    %v862 = vpop.f32.mrf.mxu0
    %v863 = vadd.f32 0.0, %v862
    %v864 = vpop.f32.mrf.mxu0
    %865 = vmatprep.mubr.bf16.mxu0 0
    %866 = vmatmul.mubr.bf16.gmra.mxu0 %v87
    %v867 = vpop.f32.mrf.mxu0
    %v868 = vadd.f32 0.0, %v867
    %v869 = vpop.f32.mrf.mxu0
    %v870 = vpop.f32.mrf.mxu0
    %v871 = vadd.f32 0.0, %v870
    %v872 = vpop.f32.mrf.mxu0
    %873 = vdwg.mxu0
    %v874 = vmul.f32 %v844, %v157
    %v875 = vmul.f32 %v847, %v162
    %v876 = vmul.f32 %v852, %v167
    %v877 = vmul.f32 %v855, %v172
    %v878 = vmul.f32 %v860, %v177
    %v879 = vmul.f32 %v863, %v182
    %v880 = vmul.f32 %v868, %v187
    %v881 = vmul.f32 %v871, %v192
    %v882 = vpack.c.bf16 %v875, %v874
    %v883 = vpack.c.bf16 %v877, %v876
    %v884 = vpack.c.bf16 %v879, %v878
    %v885 = vpack.c.bf16 %v881, %v880
    %890 = vrot.lane.b32.xlu0 %v805, 32
    %v891 = vpop.permute.xlu0 %890
    %892 = vrot.lane.b32.xlu0 %v806, 32
    %v893 = vpop.permute.xlu0 %892
    %894 = vrot.lane.b32.xlu0 %v807, 32
    %v895 = vpop.permute.xlu0 %894
    %896 = vrot.lane.b32.xlu0 %v808, 32
    %v897 = vpop.permute.xlu0 %896
    %v900 = vsel %vm218, %v882, %v891
    %v903 = vsel %vm218, %v883, %v893
    %v906 = vsel %vm218, %v884, %v895
    %v909 = vsel %vm218, %v885, %v897
    %s910 = scalar_lea.vmem %s3, 96
    %v911 = vld [vmem:[%s910] sm:$0xf]
    %v912 = vld [vmem:[%s910 + $0x4] sm:$0xf]
    %v913 = vld [vmem:[%s910 + $0x8] sm:$0xf]
    %v914 = vld [vmem:[%s910 + $0xc] sm:$0xf]
    %v915 = vld [vmem:[%s910 + $0x10] sm:$0xf]
    %v916 = vld [vmem:[%s910 + $0x14] sm:$0xf]
    %v917 = vld [vmem:[%s910 + $0x18] sm:$0xf]
    %v918 = vld [vmem:[%s910 + $0x1c] sm:$0xf]
    %s919 = scalar_lea.vmem %s4, 3
    %v920 = vld [vmem:[%s919] sm:$0x1]
    %v922 = vlaneseq
    %v923 = vshrl.u32 %v922, 7
    %v924 = vsub.s32 0, %v923
    %v925 = vrot.slane %v920, %v924
    %v935 = vunpack.c.l.b16 %v911
    %v936 = vunpack.c.l.b16 %v912
    %v937 = vunpack.c.l.b16 %v913
    %v938 = vunpack.c.l.b16 %v914
    %v939 = vunpack.c.l.b16 %v915
    %v940 = vunpack.c.l.b16 %v916
    %v941 = vunpack.c.l.b16 %v917
    %v942 = vunpack.c.l.b16 %v918
    %v943 = vpack.c.b16 %v936, %v935
    %v944 = vpack.c.b16 %v938, %v937
    %v945 = vpack.c.b16 %v940, %v939
    %v946 = vpack.c.b16 %v942, %v941
    %v951 = vsel %vm76, %v900, 0
    %v953 = vsel %vm76, %v903, 0
    %v955 = vsel %vm76, %v906, 0
    %v957 = vsel %vm76, %v909, 0
    %959 = vmatprep.subr.bf16.mxu0 0
    %960 = vmatpush1.bf16.msra.mxu0 0
    %961 = vmatprep.subr.bf16.mxu0 0
    %962 = vmatpush1.bf16.msra.mxu0 0
    %963 = vmatprep.subr.bf16.mxu0 0
    %964 = vmatpush1.bf16.msra.mxu0 0
    %965 = vmatprep.subr.bf16.mxu0 0
    %966 = vmatpush1.bf16.msra.mxu0 0
    %967 = vmatprep.subr.bf16.mxu0 0
    %968 = vmatpush1.bf16.msra.mxu0 %v946
    %969 = vmatprep.subr.bf16.mxu0 0
    %970 = vmatpush1.bf16.msra.mxu0 %v945
    %971 = vmatprep.subr.bf16.mxu0 0
    %972 = vmatpush1.bf16.msra.mxu0 %v944
    %973 = vmatprep.subr.bf16.mxu0 0
    %974 = vmatpush1.bf16.msra.mxu0 %v943
    %975 = vmatprep.subr.bf16.mxu0 0
    %976 = vmatpush2.bf16.msra.mxu0 0
    %977 = vmatprep.subr.bf16.mxu0 0
    %978 = vmatpush2.bf16.msra.mxu0 0
    %979 = vmatprep.subr.bf16.mxu0 0
    %980 = vmatpush2.bf16.msra.mxu0 0
    %981 = vmatprep.subr.bf16.mxu0 0
    %982 = vmatpush2.bf16.msra.mxu0 0
    %983 = vmatprep.subr.bf16.mxu0 0
    %984 = vmatpush2.bf16.msra.mxu0 0
    %985 = vmatprep.subr.bf16.mxu0 0
    %986 = vmatpush2.bf16.msra.mxu0 0
    %987 = vmatprep.subr.bf16.mxu0 0
    %988 = vmatpush2.bf16.msra.mxu0 0
    %989 = vmatprep.subr.bf16.mxu0 0
    %990 = vmatpush2.bf16.msra.mxu0 0
    %991 = vmatprep.mubr.bf16.mxu0 0
    %992 = vmatmul.mubr.bf16.gmra.mxu0 %v951
    %v993 = vpop.f32.mrf.mxu0
    %v994 = vadd.f32 %v925, %v993
    %v995 = vpop.f32.mrf.mxu0
    %v996 = vpop.f32.mrf.mxu0
    %v997 = vadd.f32 %v925, %v996
    %v998 = vpop.f32.mrf.mxu0
    %999 = vmatprep.mubr.bf16.mxu0 0
    %1000 = vmatmul.mubr.bf16.gmra.mxu0 %v953
    %v1001 = vpop.f32.mrf.mxu0
    %v1002 = vadd.f32 %v925, %v1001
    %v1003 = vpop.f32.mrf.mxu0
    %v1004 = vpop.f32.mrf.mxu0
    %v1005 = vadd.f32 %v925, %v1004
    %v1006 = vpop.f32.mrf.mxu0
    %1007 = vmatprep.mubr.bf16.mxu0 0
    %1008 = vmatmul.mubr.bf16.gmra.mxu0 %v955
    %v1009 = vpop.f32.mrf.mxu0
    %v1010 = vadd.f32 %v925, %v1009
    %v1011 = vpop.f32.mrf.mxu0
    %v1012 = vpop.f32.mrf.mxu0
    %v1013 = vadd.f32 %v925, %v1012
    %v1014 = vpop.f32.mrf.mxu0
    %1015 = vmatprep.mubr.bf16.mxu0 0
    %1016 = vmatmul.mubr.bf16.gmra.mxu0 %v957
    %v1017 = vpop.f32.mrf.mxu0
    %v1018 = vadd.f32 %v925, %v1017
    %v1019 = vpop.f32.mrf.mxu0
    %v1020 = vpop.f32.mrf.mxu0
    %v1021 = vadd.f32 %v925, %v1020
    %v1022 = vpop.f32.mrf.mxu0
    %1023 = vdwg.mxu0
    %v1024 = vmax.f32 %v994, 0.0
    %v1025 = vmax.f32 %v997, 0.0
    %v1026 = vmax.f32 %v1002, 0.0
    %v1027 = vmax.f32 %v1005, 0.0
    %v1028 = vmax.f32 %v1010, 0.0
    %v1029 = vmax.f32 %v1013, 0.0
    %v1030 = vmax.f32 %v1018, 0.0
    %v1031 = vmax.f32 %v1021, 0.0
    %v1032 = vpack.c.bf16 %v1025, %v1024
    %v1033 = vpack.c.bf16 %v1027, %v1026
    %v1034 = vpack.c.bf16 %v1029, %v1028
    %v1035 = vpack.c.bf16 %v1031, %v1030
    %1036 = vmatprep.subr.bf16.mxu0 0
    %1037 = vmatpush1.bf16.msra.mxu0 0
    %1038 = vmatprep.subr.bf16.mxu0 0
    %1039 = vmatpush1.bf16.msra.mxu0 0
    %1040 = vmatprep.subr.bf16.mxu0 0
    %1041 = vmatpush1.bf16.msra.mxu0 0
    %1042 = vmatprep.subr.bf16.mxu0 0
    %1043 = vmatpush1.bf16.msra.mxu0 0
    %1044 = vmatprep.subr.bf16.mxu0 0
    %1045 = vmatpush1.bf16.msra.mxu0 %v1035
    %1046 = vmatprep.subr.bf16.mxu0 0
    %1047 = vmatpush1.bf16.msra.mxu0 %v1034
    %1048 = vmatprep.subr.bf16.mxu0 0
    %1049 = vmatpush1.bf16.msra.mxu0 %v1033
    %1050 = vmatprep.subr.bf16.mxu0 0
    %1051 = vmatpush1.bf16.msra.mxu0 %v1032
    %1052 = vmatprep.subr.bf16.mxu0 0
    %1053 = vmatpush2.bf16.msra.mxu0 0
    %1054 = vmatprep.subr.bf16.mxu0 0
    %1055 = vmatpush2.bf16.msra.mxu0 0
    %1056 = vmatprep.subr.bf16.mxu0 0
    %1057 = vmatpush2.bf16.msra.mxu0 0
    %1058 = vmatprep.subr.bf16.mxu0 0
    %1059 = vmatpush2.bf16.msra.mxu0 0
    %1060 = vmatprep.subr.bf16.mxu0 0
    %1061 = vmatpush2.bf16.msra.mxu0 0
    %1062 = vmatprep.subr.bf16.mxu0 0
    %1063 = vmatpush2.bf16.msra.mxu0 0
    %1064 = vmatprep.subr.bf16.mxu0 0
    %1065 = vmatpush2.bf16.msra.mxu0 0
    %1066 = vmatprep.subr.bf16.mxu0 0
    %1067 = vmatpush2.bf16.msra.mxu0 0
    %1068 = vmatprep.mubr.bf16.mxu0 0
    %1069 = vmatmul.mubr.bf16.gmra.mxu0 %v78
    %v1070 = vpop.f32.mrf.mxu0
    %v1071 = vadd.f32 0.0, %v1070
    %v1072 = vpop.f32.mrf.mxu0
    %v1073 = vpop.f32.mrf.mxu0
    %v1074 = vadd.f32 0.0, %v1073
    %v1075 = vpop.f32.mrf.mxu0
    %1076 = vmatprep.mubr.bf16.mxu0 0
    %1077 = vmatmul.mubr.bf16.gmra.mxu0 %v81
    %v1078 = vpop.f32.mrf.mxu0
    %v1079 = vadd.f32 0.0, %v1078
    %v1080 = vpop.f32.mrf.mxu0
    %v1081 = vpop.f32.mrf.mxu0
    %v1082 = vadd.f32 0.0, %v1081
    %v1083 = vpop.f32.mrf.mxu0
    %1084 = vmatprep.mubr.bf16.mxu0 0
    %1085 = vmatmul.mubr.bf16.gmra.mxu0 %v84
    %v1086 = vpop.f32.mrf.mxu0
    %v1087 = vadd.f32 0.0, %v1086
    %v1088 = vpop.f32.mrf.mxu0
    %v1089 = vpop.f32.mrf.mxu0
    %v1090 = vadd.f32 0.0, %v1089
    %v1091 = vpop.f32.mrf.mxu0
    %1092 = vmatprep.mubr.bf16.mxu0 0
    %1093 = vmatmul.mubr.bf16.gmra.mxu0 %v87
    %v1094 = vpop.f32.mrf.mxu0
    %v1095 = vadd.f32 0.0, %v1094
    %v1096 = vpop.f32.mrf.mxu0
    %v1097 = vpop.f32.mrf.mxu0
    %v1098 = vadd.f32 0.0, %v1097
    %v1099 = vpop.f32.mrf.mxu0
    %1100 = vdwg.mxu0
    %v1101 = vmul.f32 %v1071, %v157
    %v1102 = vmul.f32 %v1074, %v162
    %v1103 = vmul.f32 %v1079, %v167
    %v1104 = vmul.f32 %v1082, %v172
    %v1105 = vmul.f32 %v1087, %v177
    %v1106 = vmul.f32 %v1090, %v182
    %v1107 = vmul.f32 %v1095, %v187
    %v1108 = vmul.f32 %v1098, %v192
    %v1109 = vpack.c.bf16 %v1102, %v1101
    %v1110 = vpack.c.bf16 %v1104, %v1103
    %v1111 = vpack.c.bf16 %v1106, %v1105
    %v1112 = vpack.c.bf16 %v1108, %v1107
    %1117 = vrot.lane.b32.xlu0 %v1032, 32
    %v1118 = vpop.permute.xlu0 %1117
    %1119 = vrot.lane.b32.xlu0 %v1033, 32
    %v1120 = vpop.permute.xlu0 %1119
    %1121 = vrot.lane.b32.xlu0 %v1034, 32
    %v1122 = vpop.permute.xlu0 %1121
    %1123 = vrot.lane.b32.xlu0 %v1035, 32
    %v1124 = vpop.permute.xlu0 %1123
    %v1127 = vsel %vm218, %v1109, %v1118
    %v1130 = vsel %vm218, %v1110, %v1120
    %v1133 = vsel %vm218, %v1111, %v1122
    %v1136 = vsel %vm218, %v1112, %v1124
    %s1137 = scalar_lea.vmem %s3, 128
    %v1138 = vld [vmem:[%s1137] sm:$0xf]
    %v1139 = vld [vmem:[%s1137 + $0x4] sm:$0xf]
    %v1140 = vld [vmem:[%s1137 + $0x8] sm:$0xf]
    %v1141 = vld [vmem:[%s1137 + $0xc] sm:$0xf]
    %v1142 = vld [vmem:[%s1137 + $0x10] sm:$0xf]
    %v1143 = vld [vmem:[%s1137 + $0x14] sm:$0xf]
    %v1144 = vld [vmem:[%s1137 + $0x18] sm:$0xf]
    %v1145 = vld [vmem:[%s1137 + $0x1c] sm:$0xf]
    %s1146 = scalar_lea.vmem %s4, 4
    %v1147 = vld [vmem:[%s1146] sm:$0x1]
    %v1149 = vlaneseq
    %v1150 = vshrl.u32 %v1149, 7
    %v1151 = vsub.s32 0, %v1150
    %v1152 = vrot.slane %v1147, %v1151
    %v1162 = vunpack.c.l.b16 %v1138
    %v1163 = vunpack.c.l.b16 %v1139
    %v1164 = vunpack.c.l.b16 %v1140
    %v1165 = vunpack.c.l.b16 %v1141
    %v1166 = vunpack.c.l.b16 %v1142
    %v1167 = vunpack.c.l.b16 %v1143
    %v1168 = vunpack.c.l.b16 %v1144
    %v1169 = vunpack.c.l.b16 %v1145
    %v1170 = vpack.c.b16 %v1163, %v1162
    %v1171 = vpack.c.b16 %v1165, %v1164
    %v1172 = vpack.c.b16 %v1167, %v1166
    %v1173 = vpack.c.b16 %v1169, %v1168
    %v1178 = vsel %vm76, %v1127, 0
    %v1180 = vsel %vm76, %v1130, 0
    %v1182 = vsel %vm76, %v1133, 0
    %v1184 = vsel %vm76, %v1136, 0
    %1186 = vmatprep.subr.bf16.mxu0 0
    %1187 = vmatpush1.bf16.msra.mxu0 0
    %1188 = vmatprep.subr.bf16.mxu0 0
    %1189 = vmatpush1.bf16.msra.mxu0 0
    %1190 = vmatprep.subr.bf16.mxu0 0
    %1191 = vmatpush1.bf16.msra.mxu0 0
    %1192 = vmatprep.subr.bf16.mxu0 0
    %1193 = vmatpush1.bf16.msra.mxu0 0
    %1194 = vmatprep.subr.bf16.mxu0 0
    %1195 = vmatpush1.bf16.msra.mxu0 %v1173
    %1196 = vmatprep.subr.bf16.mxu0 0
    %1197 = vmatpush1.bf16.msra.mxu0 %v1172
    %1198 = vmatprep.subr.bf16.mxu0 0
    %1199 = vmatpush1.bf16.msra.mxu0 %v1171
    %1200 = vmatprep.subr.bf16.mxu0 0
    %1201 = vmatpush1.bf16.msra.mxu0 %v1170
    %1202 = vmatprep.subr.bf16.mxu0 0
    %1203 = vmatpush2.bf16.msra.mxu0 0
    %1204 = vmatprep.subr.bf16.mxu0 0
    %1205 = vmatpush2.bf16.msra.mxu0 0
    %1206 = vmatprep.subr.bf16.mxu0 0
    %1207 = vmatpush2.bf16.msra.mxu0 0
    %1208 = vmatprep.subr.bf16.mxu0 0
    %1209 = vmatpush2.bf16.msra.mxu0 0
    %1210 = vmatprep.subr.bf16.mxu0 0
    %1211 = vmatpush2.bf16.msra.mxu0 0
    %1212 = vmatprep.subr.bf16.mxu0 0
    %1213 = vmatpush2.bf16.msra.mxu0 0
    %1214 = vmatprep.subr.bf16.mxu0 0
    %1215 = vmatpush2.bf16.msra.mxu0 0
    %1216 = vmatprep.subr.bf16.mxu0 0
    %1217 = vmatpush2.bf16.msra.mxu0 0
    %1218 = vmatprep.mubr.bf16.mxu0 0
    %1219 = vmatmul.mubr.bf16.gmra.mxu0 %v1178
    %v1220 = vpop.f32.mrf.mxu0
    %v1221 = vadd.f32 %v1152, %v1220
    %v1222 = vpop.f32.mrf.mxu0
    %v1223 = vpop.f32.mrf.mxu0
    %v1224 = vadd.f32 %v1152, %v1223
    %v1225 = vpop.f32.mrf.mxu0
    %1226 = vmatprep.mubr.bf16.mxu0 0
    %1227 = vmatmul.mubr.bf16.gmra.mxu0 %v1180
    %v1228 = vpop.f32.mrf.mxu0
    %v1229 = vadd.f32 %v1152, %v1228
    %v1230 = vpop.f32.mrf.mxu0
    %v1231 = vpop.f32.mrf.mxu0
    %v1232 = vadd.f32 %v1152, %v1231
    %v1233 = vpop.f32.mrf.mxu0
    %1234 = vmatprep.mubr.bf16.mxu0 0
    %1235 = vmatmul.mubr.bf16.gmra.mxu0 %v1182
    %v1236 = vpop.f32.mrf.mxu0
    %v1237 = vadd.f32 %v1152, %v1236
    %v1238 = vpop.f32.mrf.mxu0
    %v1239 = vpop.f32.mrf.mxu0
    %v1240 = vadd.f32 %v1152, %v1239
    %v1241 = vpop.f32.mrf.mxu0
    %1242 = vmatprep.mubr.bf16.mxu0 0
    %1243 = vmatmul.mubr.bf16.gmra.mxu0 %v1184
    %v1244 = vpop.f32.mrf.mxu0
    %v1245 = vadd.f32 %v1152, %v1244
    %v1246 = vpop.f32.mrf.mxu0
    %v1247 = vpop.f32.mrf.mxu0
    %v1248 = vadd.f32 %v1152, %v1247
    %v1249 = vpop.f32.mrf.mxu0
    %1250 = vdwg.mxu0
    %v1251 = vmax.f32 %v1221, 0.0
    %v1252 = vmax.f32 %v1224, 0.0
    %v1253 = vmax.f32 %v1229, 0.0
    %v1254 = vmax.f32 %v1232, 0.0
    %v1255 = vmax.f32 %v1237, 0.0
    %v1256 = vmax.f32 %v1240, 0.0
    %v1257 = vmax.f32 %v1245, 0.0
    %v1258 = vmax.f32 %v1248, 0.0
    %v1259 = vld [vmem:[%s5] sm:$0xff]
    %v1260 = vld [vmem:[%s5 + $0x8] sm:$0xff]
    %v1261 = vld [vmem:[%s5 + $0x10] sm:$0xff]
    %v1262 = vld [vmem:[%s5 + $0x18] sm:$0xff]
    %v1263 = vld [vmem:[%s6] sm:$0x1]
    %v1265 = vlaneseq
    %v1266 = vshrl.u32 %v1265, 7
    %v1267 = vsub.s32 0, %v1266
    %v1268 = vrot.slane %v1263, %v1267
    %v1271 = vsel %vm218, %v1251, 0
    %v1274 = vsel %vm218, %v1252, 0
    %v1277 = vsel %vm218, %v1253, 0
    %v1280 = vsel %vm218, %v1254, 0
    %v1283 = vsel %vm218, %v1255, 0
    %v1286 = vsel %vm218, %v1256, 0
    %v1289 = vsel %vm218, %v1257, 0
    %v1292 = vsel %vm218, %v1258, 0
    %1294 = vmatprep.subr.mxu0 0.0
    %1295 = vmatpush1.msra.mxu0 0.0
    %1296 = vmatprep.subr.mxu0 0.0
    %1297 = vmatpush1.msra.mxu0 0.0
    %1298 = vmatprep.subr.mxu0 0.0
    %1299 = vmatpush1.msra.mxu0 0.0
    %1300 = vmatprep.subr.mxu0 0.0
    %1301 = vmatpush1.msra.mxu0 0.0
    %1302 = vmatprep.subr.mxu0 0.0
    %1303 = vmatpush1.msra.mxu0 0.0
    %1304 = vmatprep.subr.mxu0 0.0
    %1305 = vmatpush1.msra.mxu0 0.0
    %1306 = vmatprep.subr.mxu0 0.0
    %1307 = vmatpush1.msra.mxu0 0.0
    %1308 = vmatprep.subr.mxu0 0.0
    %1309 = vmatpush1.msra.mxu0 0.0
    %1310 = vmatprep.subr.mxu0 0.0
    %1311 = vmatpush1.msra.mxu0 0.0
    %1312 = vmatprep.subr.mxu0 0.0
    %1313 = vmatpush1.msra.mxu0 0.0
    %1314 = vmatprep.subr.mxu0 0.0
    %1315 = vmatpush1.msra.mxu0 0.0
    %1316 = vmatprep.subr.mxu0 0.0
    %1317 = vmatpush1.msra.mxu0 0.0
    %1318 = vmatprep.subr.mxu0 0.0
    %1319 = vmatpush1.msra.mxu0 %v1262
    %1320 = vmatprep.subr.mxu0 0.0
    %1321 = vmatpush1.msra.mxu0 %v1261
    %1322 = vmatprep.subr.mxu0 0.0
    %1323 = vmatpush1.msra.mxu0 %v1260
    %1324 = vmatprep.subr.mxu0 0.0
    %1325 = vmatpush1.msra.mxu0 %v1259
    %1326 = vmatprep.subr.mxu0 0.0
    %1327 = vmatpush2.msra.mxu0 0.0
    %1328 = vmatprep.subr.mxu0 0.0
    %1329 = vmatpush2.msra.mxu0 0.0
    %1330 = vmatprep.subr.mxu0 0.0
    %1331 = vmatpush2.msra.mxu0 0.0
    %1332 = vmatprep.subr.mxu0 0.0
    %1333 = vmatpush2.msra.mxu0 0.0
    %1334 = vmatprep.subr.mxu0 0.0
    %1335 = vmatpush2.msra.mxu0 0.0
    %1336 = vmatprep.subr.mxu0 0.0
    %1337 = vmatpush2.msra.mxu0 0.0
    %1338 = vmatprep.subr.mxu0 0.0
    %1339 = vmatpush2.msra.mxu0 0.0
    %1340 = vmatprep.subr.mxu0 0.0
    %1341 = vmatpush2.msra.mxu0 0.0
    %1342 = vmatprep.subr.mxu0 0.0
    %1343 = vmatpush2.msra.mxu0 0.0
    %1344 = vmatprep.subr.mxu0 0.0
    %1345 = vmatpush2.msra.mxu0 0.0
    %1346 = vmatprep.subr.mxu0 0.0
    %1347 = vmatpush2.msra.mxu0 0.0
    %1348 = vmatprep.subr.mxu0 0.0
    %1349 = vmatpush2.msra.mxu0 0.0
    %1350 = vmatprep.subr.mxu0 0.0
    %1351 = vmatpush2.msra.mxu0 0.0
    %1352 = vmatprep.subr.mxu0 0.0
    %1353 = vmatpush2.msra.mxu0 0.0
    %1354 = vmatprep.subr.mxu0 0.0
    %1355 = vmatpush2.msra.mxu0 0.0
    %1356 = vmatprep.subr.mxu0 0.0
    %1357 = vmatpush2.msra.mxu0 0.0
    %1358 = vmatprep.mubr.f32.mxu0 0.0
    %1359 = vmatmul.mubr.f32.gmra.mxu0 %v1271
    %v1360 = vpop.f32.mrf.mxu0
    %v1361 = vadd.f32 %v1268, %v1360
    %v1362 = vpop.f32.mrf.mxu0
    %1363 = vmatprep.mubr.f32.mxu0 0.0
    %1364 = vmatmul.mubr.f32.gmra.mxu0 %v1274
    %v1365 = vpop.f32.mrf.mxu0
    %v1366 = vadd.f32 %v1268, %v1365
    %v1367 = vpop.f32.mrf.mxu0
    %1368 = vmatprep.mubr.f32.mxu0 0.0
    %1369 = vmatmul.mubr.f32.gmra.mxu0 %v1277
    %v1370 = vpop.f32.mrf.mxu0
    %v1371 = vadd.f32 %v1268, %v1370
    %v1372 = vpop.f32.mrf.mxu0
    %1373 = vmatprep.mubr.f32.mxu0 0.0
    %1374 = vmatmul.mubr.f32.gmra.mxu0 %v1280
    %v1375 = vpop.f32.mrf.mxu0
    %v1376 = vadd.f32 %v1268, %v1375
    %v1377 = vpop.f32.mrf.mxu0
    %1378 = vmatprep.mubr.f32.mxu0 0.0
    %1379 = vmatmul.mubr.f32.gmra.mxu0 %v1283
    %v1380 = vpop.f32.mrf.mxu0
    %v1381 = vadd.f32 %v1268, %v1380
    %v1382 = vpop.f32.mrf.mxu0
    %1383 = vmatprep.mubr.f32.mxu0 0.0
    %1384 = vmatmul.mubr.f32.gmra.mxu0 %v1286
    %v1385 = vpop.f32.mrf.mxu0
    %v1386 = vadd.f32 %v1268, %v1385
    %v1387 = vpop.f32.mrf.mxu0
    %1388 = vmatprep.mubr.f32.mxu0 0.0
    %1389 = vmatmul.mubr.f32.gmra.mxu0 %v1289
    %v1390 = vpop.f32.mrf.mxu0
    %v1391 = vadd.f32 %v1268, %v1390
    %v1392 = vpop.f32.mrf.mxu0
    %1393 = vmatprep.mubr.f32.mxu0 0.0
    %1394 = vmatmul.mubr.f32.gmra.mxu0 %v1292
    %v1395 = vpop.f32.mrf.mxu0
    %v1396 = vadd.f32 %v1268, %v1395
    %v1397 = vpop.f32.mrf.mxu0
    %1398 = vdwg.mxu0
    %1399 = vst [vmem:[#allocation2] sm:$0xff] %v1361
    %1400 = vst [vmem:[#allocation2 + $0x8] sm:$0xff] %v1366
    %1401 = vst [vmem:[#allocation2 + $0x10] sm:$0xff] %v1371
    %1402 = vst [vmem:[#allocation2 + $0x18] sm:$0xff] %v1376
    %1403 = vst [vmem:[#allocation2 + $0x20] sm:$0xff] %v1381
    %1404 = vst [vmem:[#allocation2 + $0x28] sm:$0xff] %v1386
    %1405 = vst [vmem:[#allocation2 + $0x30] sm:$0xff] %v1391
    %1406 = vst [vmem:[#allocation2 + $0x38] sm:$0xff] %v1396
    // Predicated region
    $region30: #{tpu_custom_call.1} parent=1 // pred_check
      _
    $region31: #{tpu_custom_call.1} parent=1 // pred_check_branch
      %1408 = sbr.rel (0) target = $region33
    $region32: #{tpu_custom_call.1} parent=1 // pred_region
      %s1410 = ssub.s32 1024, 1024
      %1411 = vsyncadd [#allocation3], %s1410
      %s1412 = sshll.u32 [#allocation2], 4
      %s1413 = int_to_ptr.vmem [resolvable:$true] %s1412
      %1418 = dma.vmem_to_hbm [thread:$0]  %s1413, 1024, %s7, [#allocation3], 128, 128, 8
    $region33: #{tpu_custom_call.1} parent=1 // pred_fallthru
      _
    // Predicated region
    $region34: #{tpu_custom_call.1} parent=1 // pred_check
      _
    $region35: #{tpu_custom_call.1} parent=1 // pred_check_branch
      %1420 = sbr.rel (0) target = $region37
    $region36: #{tpu_custom_call.1} parent=1 // pred_region
      %1421 = dma.done [#allocation3], 1024
    $region37: #{tpu_custom_call.1} parent=1 // pred_fallthru
      _
    %1422 = vsyncpa [#allocation3], 1

</llo_original>
